<compile_context>
chip_gen: v6e
topology: v6e:2x2x1
jax: 0.10.0
libtpu: 0.0.40
codegen_flags: <defaults>
</compile_context>

<pallas_src>
import functools

import jax
import jax.numpy as jnp
from jax import lax
from jax.experimental import pallas as pl
from jax.experimental.pallas import tpu as pltpu

_LANE = 128
_SUBLANE = 8
_MAX_BLOCK_ROWS = 4096   # (4096, 128) f32 = 2 MiB per input per pipeline buffer
_CHUNK_ROWS = 256        # rows per unrolled inner-loop iteration (32 vregs/operand)


def _partial_sums_kernel(x_ref, t_ref, out_ref, *, blocks_per_core, block_rows,
                         valid_rows, first_masked_block, chunk_rows):
    c = pl.program_id(0)                 # core-parallel axis (v7x: 2 TCs)
    i = pl.program_id(1)                 # sequential streaming axis
    gb = c * blocks_per_core + i         # logical global block index

    @pl.when(i == 0)
    def _():
        out_ref[...] = jnp.zeros_like(out_ref)

    n_full = block_rows // chunk_rows    # static
    rem = block_rows % chunk_rows        # static, multiple of 8

    def fold(v, nrows):
        # Leading-axis (pure VPU) fold down to a single (8, 128) tile.
        return jnp.sum(v.reshape(nrows // _SUBLANE, _SUBLANE, _LANE), axis=0)

    def chunk_sums(start_row, nrows, masked):
        xs = x_ref[pl.ds(start_row, nrows), :].astype(jnp.float32)
        ts = t_ref[pl.ds(start_row, nrows), :].astype(jnp.float32)
        if masked:
            # Mask by *logical* global row id: covers the partial trailing
            # block (incl. zero-pad rows, which are valid zeros) and the
            # clamped phantom block when the block count is odd.
            row_ids = (gb * block_rows + start_row
                       + lax.broadcasted_iota(jnp.int32, (nrows, _LANE), 0))
            keep = row_ids < valid_rows
            xs = jnp.where(keep, xs, 0.0)
            ts = jnp.where(keep, ts, 0.0)
        return fold(xs * ts, nrows), fold(xs, nrows), fold(ts, nrows)

    def process(masked):
        zero = jnp.zeros((_SUBLANE, _LANE), jnp.float32)
        carry = (zero, zero, zero)
        if n_full > 0:
            def body(k, car):
                start = pl.multiple_of(k * chunk_rows, chunk_rows)
                d = chunk_sums(start, chunk_rows, masked)
                return (car[0] + d[0], car[1] + d[1], car[2] + d[2])
            carry = lax.fori_loop(0, n_full, body, carry, unroll=True)
        if rem > 0:
            d = chunk_sums(n_full * chunk_rows, rem, masked)
            carry = (carry[0] + d[0], carry[1] + d[1], carry[2] + d[2])
        out_ref[0, 0] += carry[0]        # sum(x * t)
        out_ref[0, 1] += carry[1]        # sum(x)
        out_ref[0, 2] += carry[2]        # sum(t)

    total_blocks = 2 * blocks_per_core
    has_unmasked = first_masked_block > 0
    has_masked = first_masked_block < total_blocks
    if has_masked and has_unmasked:
        @pl.when(gb < first_masked_block)
        def _():
            process(masked=False)

        @pl.when(gb >= first_masked_block)
        def _():
            process(masked=True)
    elif has_masked:
        process(masked=True)
    else:
        process(masked=False)


def focal_tversky_loss(inputs, targets, smooth=1.0):
    """Exact forward semantics of FocalTverskyLoss (alpha=beta=0.5, gamma=1)."""
    alpha, beta, gamma = 0.5, 0.5, 1.0

    x = inputs.reshape(-1)
    t = targets.reshape(-1)
    if t.dtype == jnp.bool_:
        t = t.astype(jnp.int8)           # exact for binary masks, 4x fewer bytes
    n = x.shape[0]

    # Lane-dense (rows, 128) layout with rows a multiple of 8.  Zero-pad only
    # when n is not a multiple of 8*128 (zeros contribute 0 to all three sums).
    tile = _SUBLANE * _LANE
    pad = (-n) % tile
    if pad:
        x = jnp.pad(x, (0, pad))
        t = jnp.pad(t, (0, pad))

    rows = (n + pad) // _LANE            # multiple of 8
    x2 = x.reshape(rows, _LANE)
    t2 = t.reshape(rows, _LANE)

    block_rows = min(_MAX_BLOCK_ROWS, rows)
    nb = pl.cdiv(rows, block_rows)       # number of real blocks
    bpc = pl.cdiv(nb, 2)                 # blocks per core (leading parallel axis)
    if rows % block_rows:
        first_masked_block = rows // block_rows   # partial trailing block onward
    else:
        first_masked_block = nb                    # only phantom block (if any)
    chunk_rows = min(_CHUNK_ROWS, block_rows)

    kernel = functools.partial(
        _partial_sums_kernel,
        blocks_per_core=bpc, block_rows=block_rows, valid_rows=rows,
        first_masked_block=first_masked_block, chunk_rows=chunk_rows)

    def in_map(c, i):
        # Clamp so the phantom block (odd block count) re-reads the last real
        # block; its contribution is fully masked away in-kernel.
        return (jnp.minimum(c * bpc + i, nb - 1), 0)

    partials = pl.pallas_call(
        kernel,
        out_shape=jax.ShapeDtypeStruct((2, 3, _SUBLANE, _LANE), jnp.float32),
        grid_spec=pltpu.PrefetchScalarGridSpec(
            num_scalar_prefetch=0,
            grid=(2, bpc),
            in_specs=[
                pl.BlockSpec((block_rows, _LANE), in_map),
                pl.BlockSpec((block_rows, _LANE), in_map),
            ],
            out_specs=pl.BlockSpec((1, 3, _SUBLANE, _LANE),
                                   lambda c, i: (c, 0, 0, 0)),
        ),
        compiler_params=pltpu.CompilerParams(
            dimension_semantics=("parallel", "arbitrary"),
        ),
    )(x2, t2)

    # Tiny finalize in JAX: combine per-core partials and apply Tversky.
    s = jnp.sum(partials, axis=(0, 2, 3))
    TP, Sx, St = s[0], s[1], s[2]
    FP = Sx - TP                          # sum((1 - t) * x)
    FN = St - TP                          # sum(t * (1 - x))
    tversky = (TP + smooth) / (TP + alpha * FP + beta * FN + smooth)
    if gamma == 1.0:
        return 1.0 - tversky
    return jnp.maximum(1.0 - tversky, 0.0) ** gamma


def _reference(inputs, targets, smooth=1.0):
    alpha, beta, gamma = 0.5, 0.5, 1.0
    x = inputs.reshape(-1).astype(jnp.float32)
    t = targets.reshape(-1).astype(jnp.float32)
    TP = jnp.sum(x * t)
    FP = jnp.sum((1.0 - t) * x)
    FN = jnp.sum(t * (1.0 - x))
    tversky = (TP + smooth) / (TP + alpha * FP + beta * FN + smooth)
    return (1.0 - tversky) ** gamma


if __name__ == "__main__":
    key = jax.random.PRNGKey(0)
    k1, k2, k3, k4, k5, k6 = jax.random.split(key, 6)

    # Test 1: small NCHW segmentation probabilities + binary targets.
    shape = (2, 4, 16, 16)
    inputs = jax.nn.sigmoid(jax.random.normal(k1, shape, dtype=jnp.float32))
    targets = (jax.random.uniform(k2, shape) > 0.5).astype(jnp.float32)
    loss = jax.block_until_ready(focal_tversky_loss(inputs, targets, smooth=1.0))
    ref = _reference(inputs, targets, smooth=1.0)
    assert jnp.allclose(loss, ref, atol=1e-5, rtol=1e-5), (loss, ref)

    # Test 2: multi-block grid + core split + unrolled chunk loop + masked
    # partial trailing block (n = 665600 -> rows = 5200, blocks of 4096).
    shape2 = (8, 4, 130, 160)
    inputs2 = jax.nn.sigmoid(jax.random.normal(k3, shape2, dtype=jnp.float32))
    targets2 = (jax.random.uniform(k4, shape2) > 0.5).astype(jnp.float32)
    loss2 = jax.block_until_ready(focal_tversky_loss(inputs2, targets2))
    ref2 = _reference(inputs2, targets2)
    assert jnp.allclose(loss2, ref2, atol=1e-5, rtol=1e-5), (loss2, ref2)

    # Test 3: unaligned size -> zero-pad fallback, remainder chunk, and a
    # fully-masked phantom block on the second core pass.
    shape3 = (4, 4, 130, 144)
    inputs3 = jax.nn.sigmoid(jax.random.normal(k5, shape3, dtype=jnp.float32))
    targets3 = (jax.random.uniform(k6, shape3) > 0.5).astype(jnp.float32)
    loss3 = jax.block_until_ready(focal_tversky_loss(inputs3, targets3))
    ref3 = _reference(inputs3, targets3)
    assert jnp.allclose(loss3, ref3, atol=1e-5, rtol=1e-5), (loss3, ref3)

    print("KERNEL_OK")
</pallas_src>

<mosaic_0001>
module attributes {stable_mosaic.version = 11 : i64} {
  func.func @_partial_sums_kernel(%arg0: i32, %arg1: i32, %arg2: memref<16x128xf32, #tpu.memory_space<vmem>>, %arg3: memref<16x128xf32, #tpu.memory_space<vmem>>, %arg4: memref<1x3x8x128xf32, #tpu.memory_space<vmem>>) attributes {dimension_semantics = [#tpu.dimension_semantics<parallel>, #tpu.dimension_semantics<arbitrary>], iteration_bounds = array<i64: 2, 1>, scalar_prefetch = 0 : i64, scratch_operands = 0 : i64, tpu.core_type = #tpu.core_type<tc>, window_params = [{transform_indices = @transform_0, window_bounds = array<i64: 16, 128>}, {transform_indices = @transform_1, window_bounds = array<i64: 16, 128>}, {transform_indices = @transform_2, window_bounds = array<i64: 1, 3, 8, 128>}]} {
    %c1_i32 = arith.constant 1 : i32
    %0 = arith.muli %arg0, %c1_i32 : i32
    %1 = arith.addi %0, %arg1 : i32
    %c0_i32 = arith.constant 0 : i32
    %2 = arith.cmpi eq, %arg1, %c0_i32 : i32
    %3 = arith.extui %2 : i1 to i32
    %c0_i32_0 = arith.constant 0 : i32
    %4 = arith.cmpi ne, %3, %c0_i32_0 : i32
    scf.if %4 {
      %cst = arith.constant 0.000000e+00 : f32
      %11 = vector.broadcast %cst : f32 to vector<1x3x8x128xf32>
      %c0 = arith.constant 0 : index
      %c0_5 = arith.constant 0 : index
      %c0_6 = arith.constant 0 : index
      %c0_7 = arith.constant 0 : index
      %12 = vector.load %arg4[%c0, %c0_5, %c0_6, %c0_7] : memref<1x3x8x128xf32, #tpu.memory_space<vmem>>, vector<1x3x8x128xf32>
      tpu.vector_store %arg4[%c0, %c0_5, %c0_6, %c0_7], %11 {strides = array<i32>} : memref<1x3x8x128xf32, #tpu.memory_space<vmem>>, vector<1x3x8x128xf32>,
    } else {
    }
    %c1_i32_1 = arith.constant 1 : i32
    %5 = arith.cmpi slt, %1, %c1_i32_1 : i32
    %6 = arith.extui %5 : i1 to i32
    %c0_i32_2 = arith.constant 0 : i32
    %7 = arith.cmpi ne, %6, %c0_i32_2 : i32
    scf.if %7 {
      %cst = arith.constant 0.000000e+00 : f32
      %11 = vector.broadcast %cst : f32 to vector<8x128xf32>
      %c0_i32_5 = arith.constant 0 : i32
      %c16_i32 = arith.constant 16 : i32
      %12 = arith.muli %c0_i32_5, %c16_i32 : i32
      %13 = tpu.assume_multiple %12, 16 : i32
      %14 = arith.index_cast %13 : i32 to index
      %c0 = arith.constant 0 : index
      %15 = vector.load %arg2[%14, %c0] : memref<16x128xf32, #tpu.memory_space<vmem>>, vector<16x128xf32>
      %16 = arith.index_cast %13 : i32 to index
      %c0_6 = arith.constant 0 : index
      %17 = vector.load %arg3[%16, %c0_6] : memref<16x128xf32, #tpu.memory_space<vmem>>, vector<16x128xf32>
      %18 = arith.mulf %15, %17 : vector<16x128xf32>
      %19 = vector.shape_cast %18 : vector<16x128xf32> to vector<2x8x128xf32>
      %cst_7 = arith.constant dense<0.000000e+00> : vector<8x128xf32>
      %20 = vector.multi_reduction <add>, %19, %cst_7 [0] : vector<2x8x128xf32> to vector<8x128xf32>
      %21 = vector.shape_cast %15 : vector<16x128xf32> to vector<2x8x128xf32>
      %cst_8 = arith.constant dense<0.000000e+00> : vector<8x128xf32>
      %22 = vector.multi_reduction <add>, %21, %cst_8 [0] : vector<2x8x128xf32> to vector<8x128xf32>
      %23 = vector.shape_cast %17 : vector<16x128xf32> to vector<2x8x128xf32>
      %cst_9 = arith.constant dense<0.000000e+00> : vector<8x128xf32>
      %24 = vector.multi_reduction <add>, %23, %cst_9 [0] : vector<2x8x128xf32> to vector<8x128xf32>
      %25 = arith.addf %11, %20 : vector<8x128xf32>
      %26 = arith.addf %11, %22 : vector<8x128xf32>
      %27 = arith.addf %11, %24 : vector<8x128xf32>
      %c1_i32_10 = arith.constant 1 : i32
      %c0_11 = arith.constant 0 : index
      %c0_12 = arith.constant 0 : index
      %c0_13 = arith.constant 0 : index
      %c0_14 = arith.constant 0 : index
      %28 = vector.load %arg4[%c0_11, %c0_12, %c0_13, %c0_14] : memref<1x3x8x128xf32, #tpu.memory_space<vmem>>, vector<1x1x8x128xf32>
      %29 = vector.shape_cast %28 : vector<1x1x8x128xf32> to vector<8x128xf32>
      %30 = arith.addf %29, %25 : vector<8x128xf32>
      %c0_15 = arith.constant 0 : index
      %c0_16 = arith.constant 0 : index
      %c0_17 = arith.constant 0 : index
      %c0_18 = arith.constant 0 : index
      %31 = vector.load %arg4[%c0_15, %c0_16, %c0_17, %c0_18] : memref<1x3x8x128xf32, #tpu.memory_space<vmem>>, vector<1x1x8x128xf32>
      %32 = vector.shape_cast %31 : vector<1x1x8x128xf32> to vector<8x128xf32>
      %33 = vector.shape_cast %30 : vector<8x128xf32> to vector<1x1x8x128xf32>
      tpu.vector_store %arg4[%c0_15, %c0_16, %c0_17, %c0_18], %33 {strides = array<i32>} : memref<1x3x8x128xf32, #tpu.memory_space<vmem>>, vector<1x1x8x128xf32>,
      %c0_19 = arith.constant 0 : index
      %c1 = arith.constant 1 : index
      %c0_20 = arith.constant 0 : index
      %c0_21 = arith.constant 0 : index
      %34 = vector.load %arg4[%c0_19, %c1, %c0_20, %c0_21] : memref<1x3x8x128xf32, #tpu.memory_space<vmem>>, vector<1x1x8x128xf32>
      %35 = vector.shape_cast %34 : vector<1x1x8x128xf32> to vector<8x128xf32>
      %36 = arith.addf %35, %26 : vector<8x128xf32>
      %c0_22 = arith.constant 0 : index
      %c1_23 = arith.constant 1 : index
      %c0_24 = arith.constant 0 : index
      %c0_25 = arith.constant 0 : index
      %37 = vector.load %arg4[%c0_22, %c1_23, %c0_24, %c0_25] : memref<1x3x8x128xf32, #tpu.memory_space<vmem>>, vector<1x1x8x128xf32>
      %38 = vector.shape_cast %37 : vector<1x1x8x128xf32> to vector<8x128xf32>
      %39 = vector.shape_cast %36 : vector<8x128xf32> to vector<1x1x8x128xf32>
      tpu.vector_store %arg4[%c0_22, %c1_23, %c0_24, %c0_25], %39 {strides = array<i32>} : memref<1x3x8x128xf32, #tpu.memory_space<vmem>>, vector<1x1x8x128xf32>,
      %c0_26 = arith.constant 0 : index
      %c2 = arith.constant 2 : index
      %c0_27 = arith.constant 0 : index
      %c0_28 = arith.constant 0 : index
      %40 = vector.load %arg4[%c0_26, %c2, %c0_27, %c0_28] : memref<1x3x8x128xf32, #tpu.memory_space<vmem>>, vector<1x1x8x128xf32>
      %41 = vector.shape_cast %40 : vector<1x1x8x128xf32> to vector<8x128xf32>
      %42 = arith.addf %41, %27 : vector<8x128xf32>
      %c0_29 = arith.constant 0 : index
      %c2_30 = arith.constant 2 : index
      %c0_31 = arith.constant 0 : index
      %c0_32 = arith.constant 0 : index
      %43 = vector.load %arg4[%c0_29, %c2_30, %c0_31, %c0_32] : memref<1x3x8x128xf32, #tpu.memory_space<vmem>>, vector<1x1x8x128xf32>
      %44 = vector.shape_cast %43 : vector<1x1x8x128xf32> to vector<8x128xf32>
      %45 = vector.shape_cast %42 : vector<8x128xf32> to vector<1x1x8x128xf32>
      tpu.vector_store %arg4[%c0_29, %c2_30, %c0_31, %c0_32], %45 {strides = array<i32>} : memref<1x3x8x128xf32, #tpu.memory_space<vmem>>, vector<1x1x8x128xf32>,
    } else {
    }
    %c1_i32_3 = arith.constant 1 : i32
    %8 = arith.cmpi sge, %1, %c1_i32_3 : i32
    %9 = arith.extui %8 : i1 to i32
    %c0_i32_4 = arith.constant 0 : i32
    %10 = arith.cmpi ne, %9, %c0_i32_4 : i32
    scf.if %10 {
      %cst = arith.constant 0.000000e+00 : f32
      %11 = vector.broadcast %cst : f32 to vector<8x128xf32>
      %c0_i32_5 = arith.constant 0 : i32
      %c16_i32 = arith.constant 16 : i32
      %12 = arith.muli %c0_i32_5, %c16_i32 : i32
      %13 = tpu.assume_multiple %12, 16 : i32
      %14 = arith.index_cast %13 : i32 to index
      %c0 = arith.constant 0 : index
      %15 = vector.load %arg2[%14, %c0] : memref<16x128xf32, #tpu.memory_space<vmem>>, vector<16x128xf32>
      %16 = arith.index_cast %13 : i32 to index
      %c0_6 = arith.constant 0 : index
      %17 = vector.load %arg3[%16, %c0_6] : memref<16x128xf32, #tpu.memory_space<vmem>>, vector<16x128xf32>
      %c16_i32_7 = arith.constant 16 : i32
      %18 = arith.muli %1, %c16_i32_7 : i32
      %19 = arith.addi %18, %13 : i32
      %20 = tpu.iota {dimensions = array<i32: 0>} : vector<16x128xi32>
      %21 = vector.broadcast %19 : i32 to vector<16x128xi32>
      %22 = arith.addi %21, %20 : vector<16x128xi32>
      %c16_i32_8 = arith.constant 16 : i32
      %23 = vector.broadcast %c16_i32_8 : i32 to vector<16x128xi32>
      %24 = arith.cmpi slt, %22, %23 : vector<16x128xi32>
      %cst_9 = arith.constant 0.000000e+00 : f32
      %25 = vector.broadcast %cst_9 : f32 to vector<16x128xf32>
      %26 = arith.select %24, %15, %25 : vector<16x128xi1>, vector<16x128xf32>
      %cst_10 = arith.constant 0.000000e+00 : f32
      %27 = vector.broadcast %cst_10 : f32 to vector<16x128xf32>
      %28 = arith.select %24, %17, %27 : vector<16x128xi1>, vector<16x128xf32>
      %29 = arith.mulf %26, %28 : vector<16x128xf32>
      %30 = vector.shape_cast %29 : vector<16x128xf32> to vector<2x8x128xf32>
      %cst_11 = arith.constant dense<0.000000e+00> : vector<8x128xf32>
      %31 = vector.multi_reduction <add>, %30, %cst_11 [0] : vector<2x8x128xf32> to vector<8x128xf32>
      %32 = vector.shape_cast %26 : vector<16x128xf32> to vector<2x8x128xf32>
      %cst_12 = arith.constant dense<0.000000e+00> : vector<8x128xf32>
      %33 = vector.multi_reduction <add>, %32, %cst_12 [0] : vector<2x8x128xf32> to vector<8x128xf32>
      %34 = vector.shape_cast %28 : vector<16x128xf32> to vector<2x8x128xf32>
      %cst_13 = arith.constant dense<0.000000e+00> : vector<8x128xf32>
      %35 = vector.multi_reduction <add>, %34, %cst_13 [0] : vector<2x8x128xf32> to vector<8x128xf32>
      %36 = arith.addf %11, %31 : vector<8x128xf32>
      %37 = arith.addf %11, %33 : vector<8x128xf32>
      %38 = arith.addf %11, %35 : vector<8x128xf32>
      %c1_i32_14 = arith.constant 1 : i32
      %c0_15 = arith.constant 0 : index
      %c0_16 = arith.constant 0 : index
      %c0_17 = arith.constant 0 : index
      %c0_18 = arith.constant 0 : index
      %39 = vector.load %arg4[%c0_15, %c0_16, %c0_17, %c0_18] : memref<1x3x8x128xf32, #tpu.memory_space<vmem>>, vector<1x1x8x128xf32>
      %40 = vector.shape_cast %39 : vector<1x1x8x128xf32> to vector<8x128xf32>
      %41 = arith.addf %40, %36 : vector<8x128xf32>
      %c0_19 = arith.constant 0 : index
      %c0_20 = arith.constant 0 : index
      %c0_21 = arith.constant 0 : index
      %c0_22 = arith.constant 0 : index
      %42 = vector.load %arg4[%c0_19, %c0_20, %c0_21, %c0_22] : memref<1x3x8x128xf32, #tpu.memory_space<vmem>>, vector<1x1x8x128xf32>
      %43 = vector.shape_cast %42 : vector<1x1x8x128xf32> to vector<8x128xf32>
      %44 = vector.shape_cast %41 : vector<8x128xf32> to vector<1x1x8x128xf32>
      tpu.vector_store %arg4[%c0_19, %c0_20, %c0_21, %c0_22], %44 {strides = array<i32>} : memref<1x3x8x128xf32, #tpu.memory_space<vmem>>, vector<1x1x8x128xf32>,
      %c0_23 = arith.constant 0 : index
      %c1 = arith.constant 1 : index
      %c0_24 = arith.constant 0 : index
      %c0_25 = arith.constant 0 : index
      %45 = vector.load %arg4[%c0_23, %c1, %c0_24, %c0_25] : memref<1x3x8x128xf32, #tpu.memory_space<vmem>>, vector<1x1x8x128xf32>
      %46 = vector.shape_cast %45 : vector<1x1x8x128xf32> to vector<8x128xf32>
      %47 = arith.addf %46, %37 : vector<8x128xf32>
      %c0_26 = arith.constant 0 : index
      %c1_27 = arith.constant 1 : index
      %c0_28 = arith.constant 0 : index
      %c0_29 = arith.constant 0 : index
      %48 = vector.load %arg4[%c0_26, %c1_27, %c0_28, %c0_29] : memref<1x3x8x128xf32, #tpu.memory_space<vmem>>, vector<1x1x8x128xf32>
      %49 = vector.shape_cast %48 : vector<1x1x8x128xf32> to vector<8x128xf32>
      %50 = vector.shape_cast %47 : vector<8x128xf32> to vector<1x1x8x128xf32>
      tpu.vector_store %arg4[%c0_26, %c1_27, %c0_28, %c0_29], %50 {strides = array<i32>} : memref<1x3x8x128xf32, #tpu.memory_space<vmem>>, vector<1x1x8x128xf32>,
      %c0_30 = arith.constant 0 : index
      %c2 = arith.constant 2 : index
      %c0_31 = arith.constant 0 : index
      %c0_32 = arith.constant 0 : index
      %51 = vector.load %arg4[%c0_30, %c2, %c0_31, %c0_32] : memref<1x3x8x128xf32, #tpu.memory_space<vmem>>, vector<1x1x8x128xf32>
      %52 = vector.shape_cast %51 : vector<1x1x8x128xf32> to vector<8x128xf32>
      %53 = arith.addf %52, %38 : vector<8x128xf32>
      %c0_33 = arith.constant 0 : index
      %c2_34 = arith.constant 2 : index
      %c0_35 = arith.constant 0 : index
      %c0_36 = arith.constant 0 : index
      %54 = vector.load %arg4[%c0_33, %c2_34, %c0_35, %c0_36] : memref<1x3x8x128xf32, #tpu.memory_space<vmem>>, vector<1x1x8x128xf32>
      %55 = vector.shape_cast %54 : vector<1x1x8x128xf32> to vector<8x128xf32>
      %56 = vector.shape_cast %53 : vector<8x128xf32> to vector<1x1x8x128xf32>
      tpu.vector_store %arg4[%c0_33, %c2_34, %c0_35, %c0_36], %56 {strides = array<i32>} : memref<1x3x8x128xf32, #tpu.memory_space<vmem>>, vector<1x1x8x128xf32>,
    } else {
    }
    return
  }
  func.func @transform_0(%arg0: i32, %arg1: i32) -> (i32, i32) {
    %c1_i32 = arith.constant 1 : i32
    %0 = arith.muli %arg0, %c1_i32 : i32
    %1 = arith.addi %0, %arg1 : i32
    %c0_i32 = arith.constant 0 : i32
    %2 = arith.minsi %1, %c0_i32 : i32
    %c0_i32_0 = arith.constant 0 : i32
    %c0_i32_1 = arith.constant 0 : i32
    return %2, %c0_i32_0 : i32, i32
  }
  func.func @transform_1(%arg0: i32, %arg1: i32) -> (i32, i32) {
    %c1_i32 = arith.constant 1 : i32
    %0 = arith.muli %arg0, %c1_i32 : i32
    %1 = arith.addi %0, %arg1 : i32
    %c0_i32 = arith.constant 0 : i32
    %2 = arith.minsi %1, %c0_i32 : i32
    %c0_i32_0 = arith.constant 0 : i32
    %c0_i32_1 = arith.constant 0 : i32
    return %2, %c0_i32_0 : i32, i32
  }
  func.func @transform_2(%arg0: i32, %arg1: i32) -> (i32, i32, i32, i32) {
    %c0_i32 = arith.constant 0 : i32
    %c0_i32_0 = arith.constant 0 : i32
    %c0_i32_1 = arith.constant 0 : i32
    %c0_i32_2 = arith.constant 0 : i32
    return %arg0, %c0_i32, %c0_i32_0, %c0_i32_1 : i32, i32, i32, i32
  }
}

</mosaic_0001>

<llo_original>
// kernel: tpu_custom_call.1
$region0: #{tpu_custom_call.1}
  #allocation0 [shape = 'u32[]', space=smem, size = 0x4, offset = 0x4, fixed_abs, tag = 'smem constant byte address 0x4 - core index']
  #allocation1 [shape = 'u32[144,128]{1,0:T(1,128)}', space=vmem, size = 0x12000, scoped, tag = 'internal scratch']
  %s0 = inlined_call_operand.hbm [shape: f32[16,128], index: 0, kind: input, shape index: {}]
  %s1 = inlined_call_operand.hbm [shape: f32[16,128], index: 1, kind: input, shape index: {}]
  %s2 = inlined_call_operand.hbm [shape: f32[2,3,8,128], index: 2, kind: output, shape index: {}]
  %s3 = sld [smem:[#allocation0]]
  $region61: #{tpu_custom_call.1} parent=0
    _
  %s5 = ssub.s32 1, %s3
  %s6 = scalar_select 0, %s5, %s3
  $region1: #{tpu_custom_call.1} parent=0
    #allocation2 [shape = 'u8[16384]{0}', space=vmem, size = 0x4000, scoped, tag = 'input window, operand 0']
    #allocation3 [shape = 's32[2]{0}', space=sflag, size = 0x8, scoped, tag = 'scoped memory for tpu_custom_call.1']
    #allocation4 [shape = 's32[2]{0}', space=sflag, size = 0x8, scoped, tag = 'scoped memory for tpu_custom_call.1']
    #allocation5 [shape = 'u8[16384]{0}', space=vmem, size = 0x4000, scoped, tag = 'input window, operand 1']
    #allocation6 [shape = 's32[2]{0}', space=sflag, size = 0x8, scoped, tag = 'scoped memory for tpu_custom_call.1']
    #allocation7 [shape = 'u8[24576]{0}', space=vmem, size = 0x6000, scoped, tag = 'output window, operand 0']
    %7 = vsyncpa [#allocation3], 0
    %s8 = scalar_lea.sflag [#allocation3], 1
    %9 = vsyncpa %s8, 0
    %10 = vsyncpa [#allocation6], 0
    %s11 = scalar_lea.sflag [#allocation6], 1
    %12 = vsyncpa %s11, 0
    %13 = vsyncpa [#allocation4], 0
    %s14 = scalar_lea.sflag [#allocation4], 1
    %15 = vsyncpa %s14, 0
    loop: start=0, step=1, limit=4
    $region2: #{tpu_custom_call.1} parent=1 // loop_pre_header
      _
    $region3: #{tpu_custom_call.1} parent=1 // loop_header
      %s17 = sphi 0, %s21
      %p18 = scmp.ge.s32.totalorder %s17, 4
      %s24 = sphi 0, %s36
      %s25 = sphi 0, %s32
      %s26 = sphi 0, %s24
      %s27 = sphi 0, %s25
      %s28 = sphi 0, %s26
      %s29 = sphi 0, %s27
      %s45 = sphi 0, %s47
      %s48 = sphi 0, %s45
      %s49 = sphi 0, %s48
      %s65 = sphi 0, %s49
      %s77 = sphi 0, %s79
      %s80 = sphi 0, %s77
      %s81 = sphi 0, %s80
      %s97 = sphi 0, %s81
      %s103 = sphi 0, %s105
      %s106 = sphi 0, %s103
      %s107 = sphi 0, %s106
      %s123 = sphi 0, %s107
    $region4: #{tpu_custom_call.1} parent=1 // loop_header_branch
      %20 = sbr.rel (%p18) target = $region8
    $region5: #{tpu_custom_call.1} parent=1 // loop_body
      %s22 = ssub.s32 %s17, 1
      %s23 = ssub.s32 %s17, 2
      %s30 = sadd.s32 1, %s25
      %p31 = scmp.ge.s32.totalorder %s30, 1
      %s32 = scalar_select %p31, 0, %s30
      %s33 = sadd.s32 1, %s24
      %s34 = scalar_select %p31, %s33, %s24
      %p35 = scmp.ge.s32.totalorder %s34, 2
      %s36 = scalar_select %p35, 0, %s34
      %s37 = sadd.s32 %s24, %s25
      %p38 = scmp.lt.s32.totalorder %s37, 0
      %s39 = scalar_select %p38, %s37, 0
      %s40 = sadd.s32 %s36, %s32
      %p41 = scmp.lt.s32.totalorder %s40, 0
      %s42 = scalar_select %p41, %s40, 0
      %s43 = ssub.s32 %s39, %s42
      %p44 = scmp.eq.s32.totalorder %s43, 0
      %s46 = sadd.s32 %s45, 1
      %s47 = scalar_select %p44, %s45, %s46
      %p50 = pneg %p44
      %p51 = scmp.eq.s32.totalorder %s17, 1
      %p52 = por %p50, %p51
      %p53 = scmp.ne.s32.totalorder %s45, %s48
      %p54 = scmp.eq.s32.totalorder %s17, 0
      %p55 = por %p53, %p54
      %p56 = scmp.ne.s32.totalorder %s45, %s48
      %p57 = scmp.eq.s32.totalorder %s22, 1
      %p58 = por %p56, %p57
      %p59 = scmp.ne.s32.totalorder %s48, %s49
      %p60 = scmp.eq.s32.totalorder %s22, 0
      %p61 = por %p59, %p60
      %p62 = scmp.ne.s32.totalorder %s48, %s49
      %p63 = scmp.eq.s32.totalorder %s23, 1
      %p64 = por %p62, %p63
      %p66 = scmp.ne.s32.totalorder %s49, %s65
      %p67 = scmp.eq.s32.totalorder %s23, 0
      %p68 = por %p66, %p67
      %s69 = sadd.s32 %s24, %s25
      %p70 = scmp.lt.s32.totalorder %s69, 0
      %s71 = scalar_select %p70, %s69, 0
      %s72 = sadd.s32 %s36, %s32
      %p73 = scmp.lt.s32.totalorder %s72, 0
      %s74 = scalar_select %p73, %s72, 0
      %s75 = ssub.s32 %s71, %s74
      %p76 = scmp.eq.s32.totalorder %s75, 0
      %s78 = sadd.s32 %s77, 1
      %s79 = scalar_select %p76, %s77, %s78
      %p82 = pneg %p76
      %p83 = scmp.eq.s32.totalorder %s17, 1
      %p84 = por %p82, %p83
      %p85 = scmp.ne.s32.totalorder %s77, %s80
      %p86 = scmp.eq.s32.totalorder %s17, 0
      %p87 = por %p85, %p86
      %p88 = scmp.ne.s32.totalorder %s77, %s80
      %p89 = scmp.eq.s32.totalorder %s22, 1
      %p90 = por %p88, %p89
      %p91 = scmp.ne.s32.totalorder %s80, %s81
      %p92 = scmp.eq.s32.totalorder %s22, 0
      %p93 = por %p91, %p92
      %p94 = scmp.ne.s32.totalorder %s80, %s81
      %p95 = scmp.eq.s32.totalorder %s23, 1
      %p96 = por %p94, %p95
      %p98 = scmp.ne.s32.totalorder %s81, %s97
      %p99 = scmp.eq.s32.totalorder %s23, 0
      %p100 = por %p98, %p99
      %s101 = ssub.s32 %s24, %s36
      %p102 = scmp.eq.s32.totalorder %s101, 0
      %s104 = sadd.s32 %s103, 1
      %s105 = scalar_select %p102, %s103, %s104
      %p108 = pneg %p102
      %p109 = scmp.eq.s32.totalorder %s17, 1
      %p110 = por %p108, %p109
      %p111 = scmp.ne.s32.totalorder %s103, %s106
      %p112 = scmp.eq.s32.totalorder %s17, 0
      %p113 = por %p111, %p112
      %p114 = scmp.ne.s32.totalorder %s103, %s106
      %p115 = scmp.eq.s32.totalorder %s22, 1
      %p116 = por %p114, %p115
      %p117 = scmp.ne.s32.totalorder %s106, %s107
      %p118 = scmp.eq.s32.totalorder %s22, 0
      %p119 = por %p117, %p118
      %p120 = scmp.ne.s32.totalorder %s106, %s107
      %p121 = scmp.eq.s32.totalorder %s23, 1
      %p122 = por %p120, %p121
      %p124 = scmp.ne.s32.totalorder %s107, %s123
      %p125 = scmp.eq.s32.totalorder %s23, 0
      %p126 = por %p124, %p125
      %p127 = scmp.le.s32.totalorder 1, %s17
      %p128 = scmp.lt.s32.totalorder %s17, 3
      %p129 = pnand %p127, %p128
      %p130 = pneg %p129
      // Predicated region
      $region9: #{tpu_custom_call.1} parent=5 // pred_check
        _
      $region10: #{tpu_custom_call.1} parent=5 // pred_check_branch
        %132 = sbr.rel (%p129) target = $region12
      $region11: #{tpu_custom_call.1} parent=5 // pred_region
        %s133 = ssub.s32 %s17, 1
      $region12: #{tpu_custom_call.1} parent=5 // pred_fallthru
        _
      %p134 = scmp.lt.s32.totalorder %s17, 2
      // Predicated region
      $region13: #{tpu_custom_call.1} parent=5 // pred_check
        %p135 = pneg %p134
      $region14: #{tpu_custom_call.1} parent=5 // pred_check_branch
        %137 = sbr.rel (%p135) target = $region16
      $region15: #{tpu_custom_call.1} parent=5 // pred_region
        // Predicated region
        $region17: #{tpu_custom_call.1} parent=15 // pred_check
          %p138 = pneg %p55
        $region18: #{tpu_custom_call.1} parent=15 // pred_check_branch
          %140 = sbr.rel (%p138) target = $region20
        $region19: #{tpu_custom_call.1} parent=15 // pred_region
          %s141 = sand.u32 %s45, 1
          %s142 = scalar_lea.sflag [#allocation3], %s141
          %s143 = sand.u32 %s45, 1
          %s144 = smul.addr %s143, 16
          %s145 = scalar_lea.vmem [#allocation2], %s144
          %s146 = sadd.s32 %s24, %s25
          %p147 = scmp.lt.s32.totalorder %s146, 0
          %s148 = scalar_select %p147, %s146, 0
          %s149 = smul.u32 2, %s148
          %s151 = ssub.s32 256, 256
          %152 = vsyncadd %s142, %s151
          %s153 = smul.addr %s149, 128
          %s154 = scalar_lea.hbm %s0, %s153
          %s155 = sshll.u32 %s145, 4
          %s156 = int_to_ptr.vmem [resolvable:$true] %s155
          %161 = dma.hbm_to_vmem [thread:$0]  %s154, 256, %s156, %s142, 128, 128, 8
        $region20: #{tpu_custom_call.1} parent=15 // pred_fallthru
          _
        // Predicated region
        $region21: #{tpu_custom_call.1} parent=15 // pred_check
          %p162 = pneg %p87
        $region22: #{tpu_custom_call.1} parent=15 // pred_check_branch
          %164 = sbr.rel (%p162) target = $region24
        $region23: #{tpu_custom_call.1} parent=15 // pred_region
          %s165 = sand.u32 %s77, 1
          %s166 = scalar_lea.sflag [#allocation6], %s165
          %s167 = sand.u32 %s77, 1
          %s168 = smul.addr %s167, 16
          %s169 = scalar_lea.vmem [#allocation5], %s168
          %s170 = sadd.s32 %s24, %s25
          %p171 = scmp.lt.s32.totalorder %s170, 0
          %s172 = scalar_select %p171, %s170, 0
          %s173 = smul.u32 2, %s172
          %s175 = ssub.s32 256, 256
          %176 = vsyncadd %s166, %s175
          %s177 = smul.addr %s173, 128
          %s178 = scalar_lea.hbm %s1, %s177
          %s179 = sshll.u32 %s169, 4
          %s180 = int_to_ptr.vmem [resolvable:$true] %s179
          %185 = dma.hbm_to_vmem [thread:$0]  %s178, 256, %s180, %s166, 128, 128, 8
        $region24: #{tpu_custom_call.1} parent=15 // pred_fallthru
          _
      $region16: #{tpu_custom_call.1} parent=5 // pred_fallthru
        _
      %p186 = scmp.le.s32.totalorder 1, %s17
      %p187 = scmp.lt.s32.totalorder %s17, 3
      %p188 = pnand %p186, %p187
      %p189 = pneg %p188
      // Predicated region
      $region25: #{tpu_custom_call.1} parent=5 // pred_check
        _
      $region26: #{tpu_custom_call.1} parent=5 // pred_check_branch
        %191 = sbr.rel (%p188) target = $region28
      $region27: #{tpu_custom_call.1} parent=5 // pred_region
        %s192 = ssub.s32 %s17, 1
        %s193 = sand.u32 %s48, 1
        %s194 = scalar_lea.sflag [#allocation3], %s193
        %s195 = sand.u32 %s48, 1
        %s196 = smul.addr %s195, 16
        %s197 = scalar_lea.vmem [#allocation2], %s196
        // Predicated region
        $region29: #{tpu_custom_call.1} parent=27 // pred_check
          %p198 = pneg %p61
        $region30: #{tpu_custom_call.1} parent=27 // pred_check_branch
          %200 = sbr.rel (%p198) target = $region32
        $region31: #{tpu_custom_call.1} parent=27 // pred_region
          %201 = dma.done %s194, 256
        $region32: #{tpu_custom_call.1} parent=27 // pred_fallthru
          _
        %s202 = sand.u32 %s80, 1
        %s203 = scalar_lea.sflag [#allocation6], %s202
        %s204 = sand.u32 %s80, 1
        %s205 = smul.addr %s204, 16
        %s206 = scalar_lea.vmem [#allocation5], %s205
        // Predicated region
        $region33: #{tpu_custom_call.1} parent=27 // pred_check
          %p207 = pneg %p93
        $region34: #{tpu_custom_call.1} parent=27 // pred_check_branch
          %209 = sbr.rel (%p207) target = $region36
        $region35: #{tpu_custom_call.1} parent=27 // pred_region
          %210 = dma.done %s203, 256
        $region36: #{tpu_custom_call.1} parent=27 // pred_fallthru
          _
        %s211 = sand.u32 %s48, 1
        %s212 = scalar_lea.sflag [#allocation3], %s211
        %s213 = sand.u32 %s48, 1
        %s214 = smul.addr %s213, 16
        %s215 = scalar_lea.vmem [#allocation2], %s214
        %p216 = pneg %p61
        %p217 = pneg %p58
        %s218 = sand.u32 %s80, 1
        %s219 = scalar_lea.sflag [#allocation6], %s218
        %s220 = sand.u32 %s80, 1
        %s221 = smul.addr %s220, 16
        %s222 = scalar_lea.vmem [#allocation5], %s221
        %p223 = pneg %p93
        %p224 = pneg %p90
        %p225 = pneg %p119
        %p226 = pneg %p116
        %s227 = sand.u32 %s106, 1
        %s228 = scalar_lea.sflag [#allocation4], %s227
        %s229 = sand.u32 %s106, 1
        %s230 = smul.addr %s229, 24
        %s231 = scalar_lea.vmem [#allocation7], %s230
        %s232 = sadd.s32 %s26, %s27
        %p233 = scmp.lt.s32.totalorder %s232, 0
        %s234 = scalar_select %p233, %s232, 0
        %s235 = smul.u32 2, %s234
        %s236 = sadd.s32 %s26, %s27
        %p237 = scmp.lt.s32.totalorder %s236, 0
        %s238 = scalar_select %p237, %s236, 0
        %s239 = smul.u32 2, %s238
        %s240 = sadd.s32 %s26, %s27
        %p241 = scmp.eq.s32.totalorder %s27, 0
        // Predicated region
        $region37: #{tpu_custom_call.1} parent=27 // pred_check
          %p242 = pneg %p241
        $region38: #{tpu_custom_call.1} parent=27 // pred_check_branch
          %244 = sbr.rel (%p242) target = $region40
        $region39: #{tpu_custom_call.1} parent=27 // pred_region
          %245 = vst [vmem:[%s231] sm:$0xff] 0.0
          %246 = vst [vmem:[%s231 + $0x8] sm:$0xff] 0.0
          %247 = vst [vmem:[%s231 + $0x10] sm:$0xff] 0.0
        $region40: #{tpu_custom_call.1} parent=27 // pred_fallthru
          _
        %p248 = scmp.lt.s32.totalorder %s240, 1
        // Predicated region
        $region41: #{tpu_custom_call.1} parent=27 // pred_check
          %p249 = pneg %p248
        $region42: #{tpu_custom_call.1} parent=27 // pred_check_branch
          %251 = sbr.rel (%p249) target = $region44
        $region43: #{tpu_custom_call.1} parent=27 // pred_region
          %v252 = vld [vmem:[%s197] sm:$0xff]
          %v253 = vld [vmem:[%s197 + $0x8] sm:$0xff]
          %v254 = vld [vmem:[%s206] sm:$0xff]
          %v255 = vld [vmem:[%s206 + $0x8] sm:$0xff]
          %v256 = vmul.f32 %v252, %v254
          %v257 = vmul.f32 %v253, %v255
          %v258 = vadd.f32 %v256, %v257
          %v259 = vadd.f32 %v252, %v253
          %v260 = vadd.f32 %v254, %v255
          %v261 = vadd.f32 %v258, 0.0
          %v262 = vadd.f32 %v259, 0.0
          %v263 = vadd.f32 %v260, 0.0
          %v264 = vld [vmem:[%s231] sm:$0xff]
          %v265 = vadd.f32 %v264, %v261
          %266 = vst [vmem:[%s231] sm:$0xff] %v265
          %s267 = scalar_lea.vmem %s231, 8 [#allocation7]
          %v268 = vld [vmem:[%s267] sm:$0xff]
          %v269 = vadd.f32 %v268, %v262
          %270 = vst [vmem:[%s267] sm:$0xff] %v269
          %s271 = scalar_lea.vmem %s231, 16 [#allocation7]
          %v272 = vld [vmem:[%s271] sm:$0xff]
          %v273 = vadd.f32 %v272, %v263
          %274 = vst [vmem:[%s271] sm:$0xff] %v273
        $region44: #{tpu_custom_call.1} parent=27 // pred_fallthru
          _
        %p275 = scmp.ge.s32.totalorder %s240, 1
        // Predicated region
        $region45: #{tpu_custom_call.1} parent=27 // pred_check
          %p276 = pneg %p275
        $region46: #{tpu_custom_call.1} parent=27 // pred_check_branch
          %278 = sbr.rel (%p276) target = $region48
        $region47: #{tpu_custom_call.1} parent=27 // pred_region
          %v279 = vld [vmem:[%s197] sm:$0xff]
          %v280 = vld [vmem:[%s197 + $0x8] sm:$0xff]
          %v281 = vld [vmem:[%s206] sm:$0xff]
          %v282 = vld [vmem:[%s206 + $0x8] sm:$0xff]
          %s283 = smul.u32 %s240, 16
          %s284 = sadd.s32 %s283, 0
          %v285 = vlaneseq
          %v286 = vshrl.u32 %v285, 7
          %v287 = vadd.s32 %v286, 8
          %v288 = vstv %s284
          %v289 = vadd.s32 %v288, %v286
          %v290 = vadd.s32 %v288, %v287
          %vm291 = vcmp.lt.s32.totalorder %v289, 16
          %vm292 = vcmp.lt.s32.totalorder %v290, 16
          %v293 = vsel %vm291, %v279, 0.0
          %v294 = vsel %vm292, %v280, 0.0
          %v295 = vsel %vm291, %v281, 0.0
          %v296 = vsel %vm292, %v282, 0.0
          %v297 = vmul.f32 %v293, %v295
          %v298 = vmul.f32 %v294, %v296
          %v299 = vadd.f32 %v297, %v298
          %v300 = vadd.f32 %v293, %v294
          %v301 = vadd.f32 %v295, %v296
          %v302 = vadd.f32 %v299, 0.0
          %v303 = vadd.f32 %v300, 0.0
          %v304 = vadd.f32 %v301, 0.0
          %v305 = vld [vmem:[%s231] sm:$0xff]
          %v306 = vadd.f32 %v305, %v302
          %307 = vst [vmem:[%s231] sm:$0xff] %v306
          %s308 = scalar_lea.vmem %s231, 8 [#allocation7]
          %v309 = vld [vmem:[%s308] sm:$0xff]
          %v310 = vadd.f32 %v309, %v303
          %311 = vst [vmem:[%s308] sm:$0xff] %v310
          %s312 = scalar_lea.vmem %s231, 16 [#allocation7]
          %v313 = vld [vmem:[%s312] sm:$0xff]
          %v314 = vadd.f32 %v313, %v304
          %315 = vst [vmem:[%s312] sm:$0xff] %v314
        $region48: #{tpu_custom_call.1} parent=27 // pred_fallthru
          _
        %s316 = sand.u32 %s106, 1
        %s317 = scalar_lea.sflag [#allocation4], %s316
        %s318 = sand.u32 %s106, 1
        %s319 = smul.addr %s318, 24
        %s320 = scalar_lea.vmem [#allocation7], %s319
        // Predicated region
        $region49: #{tpu_custom_call.1} parent=27 // pred_check
          %p321 = pneg %p116
        $region50: #{tpu_custom_call.1} parent=27 // pred_check_branch
          %323 = sbr.rel (%p321) target = $region52
        $region51: #{tpu_custom_call.1} parent=27 // pred_region
          %s325 = ssub.s32 384, 384
          %326 = vsyncadd %s317, %s325
          %s327 = smul.addr %s26, 3
          %s328 = smul.addr %s327, 128
          %s329 = scalar_lea.hbm %s2, %s328
          %s330 = sshll.u32 %s320, 4
          %s331 = int_to_ptr.vmem [resolvable:$true] %s330
          %336 = dma.vmem_to_hbm [thread:$0]  %s331, 384, %s329, %s317, 128, 128, 8
        $region52: #{tpu_custom_call.1} parent=27 // pred_fallthru
          _
      $region28: #{tpu_custom_call.1} parent=5 // pred_fallthru
        _
      %p337 = scmp.le.s32.totalorder 2, %s17
      // Predicated region
      $region53: #{tpu_custom_call.1} parent=5 // pred_check
        %p338 = pneg %p337
      $region54: #{tpu_custom_call.1} parent=5 // pred_check_branch
        %340 = sbr.rel (%p338) target = $region56
      $region55: #{tpu_custom_call.1} parent=5 // pred_region
        %s341 = ssub.s32 %s17, 2
        // Predicated region
        $region57: #{tpu_custom_call.1} parent=55 // pred_check
          %p342 = pneg %p122
        $region58: #{tpu_custom_call.1} parent=55 // pred_check_branch
          %344 = sbr.rel (%p342) target = $region60
        $region59: #{tpu_custom_call.1} parent=55 // pred_region
          %s345 = sand.u32 %s107, 1
          %s346 = scalar_lea.sflag [#allocation4], %s345
          %s347 = sand.u32 %s107, 1
          %s348 = smul.addr %s347, 24
          %s349 = scalar_lea.vmem [#allocation7], %s348
          %350 = dma.done %s346, 384
        $region60: #{tpu_custom_call.1} parent=55 // pred_fallthru
          _
      $region56: #{tpu_custom_call.1} parent=5 // pred_fallthru
        _
    $region6: #{tpu_custom_call.1} parent=1 // loop_footer
      %s21 = sadd.s32 1, %s17
    $region7: #{tpu_custom_call.1} parent=1 // loop_footer_branch
      %16 = sbr.rel target = $region3
    $region8: #{tpu_custom_call.1} parent=1 // loop_exit
      _
    %351 = vsyncpa [#allocation3], 1
    %s352 = scalar_lea.sflag [#allocation3], 1
    %353 = vsyncpa %s352, 1
    %354 = vsyncpa [#allocation6], 1
    %s355 = scalar_lea.sflag [#allocation6], 1
    %356 = vsyncpa %s355, 1
    %357 = vsyncpa [#allocation4], 1
    %s358 = scalar_lea.sflag [#allocation4], 1
    %359 = vsyncpa %s358, 1

</llo_original>
